<compile_context>
chip_gen: v7x
topology: tpu7x:2x2x1
jax: 0.10.0
libtpu: 0.0.40
codegen_flags: <defaults>
</compile_context>

<pallas_src>
import functools

import numpy as np
import jax
import jax.numpy as jnp
from jax import lax
from jax.experimental import pallas as pl
from jax.experimental.pallas import tpu as pltpu

# Hyperparameters (small, consistent with the PyTorch module).
MAX_FEATURES = 100          # vocab size
EMBED_SIZE = 32             # embedding dim E
SEQ_LEN = 16                # sequence length L
FILTER_SIZES = (1, 2, 3, 5)
NUM_FILTERS = 36            # F
NUM_CLASSES = 1

# Lane/sublane-friendly padded sizes.
K_MAX = max(FILTER_SIZES)                       # 5
F_PAD = 64                                      # per-bank lane padding (36 -> 64)
N_BANKS = len(FILTER_SIZES)
N_FEAT = N_BANKS * F_PAD                        # 256 lanes (lane-dense concat dim)
V_PAD = 128                                     # vocab padded for one-hot gather
OUT_LANES = 128                                 # lane-dense output tile width

assert MAX_FEATURES <= V_PAD, "one-hot gather requires vocab <= V_PAD"
assert NUM_FILTERS <= F_PAD
assert SEQ_LEN & (SEQ_LEN - 1) == 0, "in-kernel mask uses t = row & (L-1)"

# Row layout of the single packed [PACK_ROWS, N_FEAT] bf16 parameter operand.
# All scalar rows sit at 8-aligned sublane offsets.
W_ROWS = K_MAX * EMBED_SIZE                     # rows   0..159 : im2col conv weights
BIAS_ROW = W_ROWS                               # row  160      : conv bias
THRESH_ROW = BIAS_ROW + 8                       # row  168      : per-lane L - K_j
FCW_ROW = THRESH_ROW + 8                        # row  176      : fc weight (row vector)
FCB_ROW = FCW_ROW + 8                           # row  184      : fc bias (lane 0)
PACK_ROWS = FCB_ROW + 8                         # 192


def _make_kernel(tile_b):
    """Build the fused kernel for a given number of sequences per grid step."""
    tile_rows = tile_b * SEQ_LEN

    def cnn_text_kernel(ids_ref, table_ref, packed_ref, out_ref, lhs_ref):
        # 1) Embedding gather fused as a one-hot matmul (bf16 MXU, f32 accumulate).
        ids = ids_ref[...]                                             # [R, 1] i32
        vocab_iota = lax.broadcasted_iota(jnp.int32, (tile_rows, V_PAD), 1)
        onehot = (vocab_iota == ids).astype(jnp.bfloat16)              # [R, V_PAD]
        emb = jnp.dot(onehot, table_ref[...],
                      preferred_element_type=jnp.float32)              # [R, E] f32

        # 2) im2col LHS [R, K_MAX*E] assembled in VMEM scratch: lane-stripe k holds
        #    the embedding shifted up by k rows (zero tail; shifted-in rows only
        #    ever feed masked time positions or zero weight rows).
        emb_ext = jnp.concatenate(
            [emb, jnp.zeros((8, EMBED_SIZE), jnp.float32)], axis=0)    # [R+8, E]
        for k in range(K_MAX):                                         # static unroll (5)
            lhs_ref[:, k * EMBED_SIZE:(k + 1) * EMBED_SIZE] = (
                emb_ext[k:k + tile_rows, :].astype(jnp.bfloat16))

        # 3) All four conv banks in ONE K=160 MXU pass (per-bank weights are
        #    zero-padded for k >= K_j and for filter lanes >= NUM_FILTERS).
        acc = jnp.dot(lhs_ref[...], packed_ref[0:W_ROWS, :],
                      preferred_element_type=jnp.float32)              # [R, N_FEAT]

        bias = packed_ref[BIAS_ROW:BIAS_ROW + 1, :].astype(jnp.float32)
        act = jnp.maximum(acc + bias, 0.0)                             # ReLU

        # 4) Validity mask computed in-kernel: time t valid for bank j iff
        #    t <= L - K_j (threshold row). ReLU >= 0 makes zeroing safe for max.
        thresh = packed_ref[THRESH_ROW:THRESH_ROW + 1, :].astype(jnp.float32)
        t_local = (lax.broadcasted_iota(jnp.int32, (tile_rows, N_FEAT), 0)
                   & (SEQ_LEN - 1)).astype(jnp.float32)
        act = jnp.where(t_local <= thresh, act, 0.0)

        # 5) Max-pool over time (sublane reduce per sequence).
        feat = jnp.max(act.reshape(tile_b, SEQ_LEN, N_FEAT), axis=1)   # [tile_b, N_FEAT]

        # TODO(synk): nn.Dropout(0.1) is identity at inference; no RNG applied here.

        # 6) Final FC as VPU multiply + lane reduction; lane-dense output tile with
        #    the logit stored in lane 0 (padded lanes carry zero fc weight).
        fcw = packed_ref[FCW_ROW:FCW_ROW + 1, :].astype(jnp.float32)   # [1, N_FEAT]
        fcb = packed_ref[FCB_ROW:FCB_ROW + 1, 0:OUT_LANES].astype(jnp.float32)
        logit = jnp.sum(feat * fcw, axis=1, keepdims=True)             # [tile_b, 1]
        lane = lax.broadcasted_iota(jnp.int32, (tile_b, OUT_LANES), 1)
        out_ref[...] = jnp.where(lane == 0, logit + fcb, 0.0)

    return cnn_text_kernel, tile_rows


def pack_params(params):
    """One-time packing of all parameters into 2 lane-dense bf16 kernel operands."""
    emb_table, conv_params, fc_w, fc_b = params

    table_pad = np.zeros((V_PAD, EMBED_SIZE), np.float32)
    table_pad[:MAX_FEATURES] = np.asarray(emb_table, np.float32)

    packed = np.zeros((PACK_ROWS, N_FEAT), np.float32)
    for j, ((w, b), k_size) in enumerate(zip(conv_params, FILTER_SIZES)):
        c0 = j * F_PAD
        w_np = np.asarray(w, np.float32)
        for k in range(k_size):                                        # k >= k_size stays zero
            packed[k * EMBED_SIZE:(k + 1) * EMBED_SIZE,
                   c0:c0 + NUM_FILTERS] = w_np[k]
        packed[BIAS_ROW, c0:c0 + NUM_FILTERS] = np.asarray(b, np.float32)[0]
        packed[THRESH_ROW, c0:c0 + F_PAD] = float(SEQ_LEN - k_size)
        packed[FCW_ROW, c0:c0 + NUM_FILTERS] = np.asarray(fc_w, np.float32)[
            j * NUM_FILTERS:(j + 1) * NUM_FILTERS, 0]
    packed[FCB_ROW, 0] = float(np.asarray(fc_b, np.float32)[0, 0])

    return (jnp.asarray(table_pad, dtype=jnp.bfloat16),
            jnp.asarray(packed, dtype=jnp.bfloat16))


@functools.partial(jax.jit, static_argnames=("tile_b",))
def cnn_text_forward(token_ids, table_pad, packed, tile_b=8):
    """Fused forward. Raise tile_b (e.g. 32-64) for serving-size batches; the row
    grid is marked "parallel" so it also shards across v7x's two TensorCores."""
    kernel, tile_rows = _make_kernel(tile_b)
    batch = token_ids.shape[0]
    num_tiles = pl.cdiv(batch, tile_b)
    b_pad = num_tiles * tile_b
    # Padded sequences use token 0; their output rows are sliced away below.
    ids = jnp.pad(token_ids.astype(jnp.int32), ((0, b_pad - batch), (0, 0)))
    ids_rows = ids.reshape(b_pad * SEQ_LEN, 1)

    out = pl.pallas_call(
        kernel,
        out_shape=jax.ShapeDtypeStruct((b_pad, OUT_LANES), jnp.float32),
        grid_spec=pltpu.PrefetchScalarGridSpec(
            num_scalar_prefetch=0,
            grid=(num_tiles,),
            in_specs=[
                pl.BlockSpec((tile_rows, 1), lambda i: (i, 0)),          # token ids
                pl.BlockSpec((V_PAD, EMBED_SIZE), lambda i: (0, 0)),     # emb table (const)
                pl.BlockSpec((PACK_ROWS, N_FEAT), lambda i: (0, 0)),     # packed params (const)
            ],
            out_specs=pl.BlockSpec((tile_b, OUT_LANES), lambda i: (i, 0)),
            scratch_shapes=[pltpu.VMEM((tile_rows, W_ROWS), jnp.bfloat16)],
        ),
        compiler_params=pltpu.CompilerParams(
            dimension_semantics=("parallel",)),
    )(ids_rows, table_pad, packed)
    return out[:batch, :NUM_CLASSES]


def init_params(key):
    # Parameters are rounded to bf16-representable values so the kernel's bf16
    # storage is exact (the f32 reference uses the identical values).
    def q(a):
        return a.astype(jnp.bfloat16).astype(jnp.float32)

    n_k = len(FILTER_SIZES)
    keys = jax.random.split(key, 2 * n_k + 3)
    emb_table = q(jax.random.normal(keys[0], (MAX_FEATURES, EMBED_SIZE),
                                    dtype=jnp.float32) * 0.1)
    conv_params = []
    for i, k_size in enumerate(FILTER_SIZES):
        w = q(jax.random.normal(keys[1 + 2 * i], (k_size, EMBED_SIZE, NUM_FILTERS),
                                dtype=jnp.float32) * 0.05)
        b = q(jax.random.normal(keys[2 + 2 * i], (1, NUM_FILTERS),
                                dtype=jnp.float32) * 0.05)
        conv_params.append((w, b))
    fc_w = q(jax.random.normal(keys[-2], (n_k * NUM_FILTERS, NUM_CLASSES),
                               dtype=jnp.float32) * 0.05)
    fc_b = q(jax.random.normal(keys[-1], (1, NUM_CLASSES), dtype=jnp.float32) * 0.05)
    return emb_table, conv_params, fc_w, fc_b


def reference_forward(token_ids, params):
    """Pure-JAX reference mirroring the PyTorch forward (eval mode)."""
    emb_table, conv_params, fc_w, fc_b = params
    emb = jnp.take(emb_table, token_ids, axis=0)             # [B, L, E]
    feats = []
    for (w, b), k_size in zip(conv_params, FILTER_SIZES):
        l_out = SEQ_LEN - k_size + 1
        acc = jnp.zeros((emb.shape[0], l_out, NUM_FILTERS), jnp.float32)
        for k in range(k_size):
            acc = acc + jnp.einsum('ble,ef->blf', emb[:, k:k + l_out, :], w[k])
        acc = jnp.maximum(acc + b[None, :, :], 0.0)
        feats.append(jnp.max(acc, axis=1))                    # [B, F]
    feat = jnp.concatenate(feats, axis=1)                     # [B, 4F]
    return feat @ fc_w + fc_b                                 # [B, 1]


if __name__ == "__main__":
    key = jax.random.PRNGKey(0)
    k_ids, k_ids2, k_params = jax.random.split(key, 3)
    params = init_params(k_params)
    table_pad, packed = pack_params(params)

    # Small demo batch (single grid tile).
    token_ids = jax.random.randint(k_ids, (2, SEQ_LEN), 0, MAX_FEATURES,
                                   dtype=jnp.int32)
    logits = jax.block_until_ready(cnn_text_forward(token_ids, table_pad, packed))
    ref = jax.block_until_ready(reference_forward(token_ids, params))
    assert logits.shape == (2, NUM_CLASSES)
    assert jnp.allclose(logits, ref, rtol=1e-2, atol=1e-2), (logits, ref)

    # Multi-tile grid path (batch not a multiple of tile_b exercises padding).
    token_ids2 = jax.random.randint(k_ids2, (10, SEQ_LEN), 0, MAX_FEATURES,
                                    dtype=jnp.int32)
    logits2 = jax.block_until_ready(cnn_text_forward(token_ids2, table_pad, packed))
    ref2 = jax.block_until_ready(reference_forward(token_ids2, params))
    assert logits2.shape == (10, NUM_CLASSES)
    assert jnp.allclose(logits2, ref2, rtol=1e-2, atol=1e-2), (logits2, ref2)

    print("KERNEL_OK")
</pallas_src>

<mosaic_0001>
module attributes {stable_mosaic.version = 11 : i64} {
  func.func @cnn_text_kernel(%arg0: i32, %arg1: memref<128x1xi32, #tpu.memory_space<vmem>>, %arg2: memref<128x32xbf16, #tpu.memory_space<vmem>>, %arg3: memref<192x256xbf16, #tpu.memory_space<vmem>>, %arg4: memref<8x128xf32, #tpu.memory_space<vmem>>, %arg5: memref<128x160xbf16, #tpu.memory_space<vmem>>) attributes {dimension_semantics = [#tpu.dimension_semantics<parallel>], iteration_bounds = array<i64: 1>, scalar_prefetch = 0 : i64, scratch_operands = 1 : i64, tpu.core_type = #tpu.core_type<tc>, window_params = [{transform_indices = @transform_0, window_bounds = array<i64: 128, 1>}, {pipeline_mode = #tpu.pipeline_mode<synchronous>, transform_indices = @transform_1, window_bounds = array<i64: 128, 32>}, {pipeline_mode = #tpu.pipeline_mode<synchronous>, transform_indices = @transform_2, window_bounds = array<i64: 192, 256>}, {transform_indices = @transform_3, window_bounds = array<i64: 8, 128>}]} {
    %c0 = arith.constant 0 : index
    %c0_0 = arith.constant 0 : index
    %0 = vector.load %arg1[%c0, %c0_0] : memref<128x1xi32, #tpu.memory_space<vmem>>, vector<128x1xi32>
    %1 = tpu.iota {dimensions = array<i32: 1>} : vector<128x128xi32>
    %2 = vector.broadcast %0 : vector<128x1xi32> to vector<128x128xi32>
    %3 = arith.cmpi eq, %1, %2 : vector<128x128xi32>
    %4 = arith.extui %3 : vector<128x128xi1> to vector<128x128xi32>
    %5 = arith.sitofp %4 : vector<128x128xi32> to vector<128x128xf32>
    %6 = arith.truncf %5 : vector<128x128xf32> to vector<128x128xbf16>
    %c0_1 = arith.constant 0 : index
    %c0_2 = arith.constant 0 : index
    %7 = vector.load %arg2[%c0_1, %c0_2] : memref<128x32xbf16, #tpu.memory_space<vmem>>, vector<128x32xbf16>
    %cst = arith.constant dense<0.000000e+00> : vector<128x32xf32>
    %8 = tpu.matmul %6, %7, %cst {dimension_numbers = #tpu.dot_dimension_numbers<[1], [0], [0], [1], [0, 0, 1, 1], [], []>} : vector<128x128xbf16>, vector<128x32xbf16>, vector<128x32xf32> -> vector<128x32xf32>
    %cst_3 = arith.constant 0.000000e+00 : f32
    %9 = vector.broadcast %cst_3 : f32 to vector<8x32xf32>
    %10 = tpu.concatenate %8, %9 in 0 : vector<128x32xf32>, vector<8x32xf32> -> vector<136x32xf32>
    %11 = vector.extract_strided_slice %10 {offsets = [0, 0], sizes = [128, 32], strides = [1, 1]} : vector<136x32xf32> to vector<128x32xf32>
    %12 = arith.truncf %11 : vector<128x32xf32> to vector<128x32xbf16>
    %c0_4 = arith.constant 0 : index
    %c0_5 = arith.constant 0 : index
    %13 = vector.load %arg5[%c0_4, %c0_5] : memref<128x160xbf16, #tpu.memory_space<vmem>>, vector<128x32xbf16>
    tpu.vector_store %arg5[%c0_4, %c0_5], %12 {strides = array<i32>} : memref<128x160xbf16, #tpu.memory_space<vmem>>, vector<128x32xbf16>,
    %14 = vector.extract_strided_slice %10 {offsets = [1, 0], sizes = [128, 32], strides = [1, 1]} : vector<136x32xf32> to vector<128x32xf32>
    %15 = arith.truncf %14 : vector<128x32xf32> to vector<128x32xbf16>
    %c0_6 = arith.constant 0 : index
    %c32 = arith.constant 32 : index
    %16 = vector.load %arg5[%c0_6, %c32] : memref<128x160xbf16, #tpu.memory_space<vmem>>, vector<128x32xbf16>
    tpu.vector_store %arg5[%c0_6, %c32], %15 {strides = array<i32>} : memref<128x160xbf16, #tpu.memory_space<vmem>>, vector<128x32xbf16>,
    %17 = vector.extract_strided_slice %10 {offsets = [2, 0], sizes = [128, 32], strides = [1, 1]} : vector<136x32xf32> to vector<128x32xf32>
    %18 = arith.truncf %17 : vector<128x32xf32> to vector<128x32xbf16>
    %c0_7 = arith.constant 0 : index
    %c64 = arith.constant 64 : index
    %19 = vector.load %arg5[%c0_7, %c64] : memref<128x160xbf16, #tpu.memory_space<vmem>>, vector<128x32xbf16>
    tpu.vector_store %arg5[%c0_7, %c64], %18 {strides = array<i32>} : memref<128x160xbf16, #tpu.memory_space<vmem>>, vector<128x32xbf16>,
    %20 = vector.extract_strided_slice %10 {offsets = [3, 0], sizes = [128, 32], strides = [1, 1]} : vector<136x32xf32> to vector<128x32xf32>
    %21 = arith.truncf %20 : vector<128x32xf32> to vector<128x32xbf16>
    %c0_8 = arith.constant 0 : index
    %c96 = arith.constant 96 : index
    %22 = vector.load %arg5[%c0_8, %c96] : memref<128x160xbf16, #tpu.memory_space<vmem>>, vector<128x32xbf16>
    tpu.vector_store %arg5[%c0_8, %c96], %21 {strides = array<i32>} : memref<128x160xbf16, #tpu.memory_space<vmem>>, vector<128x32xbf16>,
    %23 = vector.extract_strided_slice %10 {offsets = [4, 0], sizes = [128, 32], strides = [1, 1]} : vector<136x32xf32> to vector<128x32xf32>
    %24 = arith.truncf %23 : vector<128x32xf32> to vector<128x32xbf16>
    %c0_9 = arith.constant 0 : index
    %c128 = arith.constant 128 : index
    %25 = vector.load %arg5[%c0_9, %c128] : memref<128x160xbf16, #tpu.memory_space<vmem>>, vector<128x32xbf16>
    tpu.vector_store %arg5[%c0_9, %c128], %24 {strides = array<i32>} : memref<128x160xbf16, #tpu.memory_space<vmem>>, vector<128x32xbf16>,
    %c0_10 = arith.constant 0 : index
    %c0_11 = arith.constant 0 : index
    %26 = vector.load %arg5[%c0_10, %c0_11] : memref<128x160xbf16, #tpu.memory_space<vmem>>, vector<128x160xbf16>
    %c0_12 = arith.constant 0 : index
    %c0_13 = arith.constant 0 : index
    %27 = vector.load %arg3[%c0_12, %c0_13] : memref<192x256xbf16, #tpu.memory_space<vmem>>, vector<160x256xbf16>
    %cst_14 = arith.constant dense<0.000000e+00> : vector<128x256xf32>
    %28 = tpu.matmul %26, %27, %cst_14 {dimension_numbers = #tpu.dot_dimension_numbers<[1], [0], [0], [1], [0, 0, 1, 1], [], []>} : vector<128x160xbf16>, vector<160x256xbf16>, vector<128x256xf32> -> vector<128x256xf32>
    %c160 = arith.constant 160 : index
    %c0_15 = arith.constant 0 : index
    %29 = vector.load %arg3[%c160, %c0_15] : memref<192x256xbf16, #tpu.memory_space<vmem>>, vector<1x256xbf16>
    %30 = arith.extf %29 : vector<1x256xbf16> to vector<1x256xf32>
    %31 = vector.broadcast %30 : vector<1x256xf32> to vector<128x256xf32>
    %32 = arith.addf %28, %31 : vector<128x256xf32>
    %cst_16 = arith.constant 0.000000e+00 : f32
    %33 = vector.broadcast %cst_16 : f32 to vector<128x256xf32>
    %34 = arith.maximumf %32, %33 : vector<128x256xf32>
    %c168 = arith.constant 168 : index
    %c0_17 = arith.constant 0 : index
    %35 = vector.load %arg3[%c168, %c0_17] : memref<192x256xbf16, #tpu.memory_space<vmem>>, vector<1x256xbf16>
    %36 = arith.extf %35 : vector<1x256xbf16> to vector<1x256xf32>
    %37 = tpu.iota {dimensions = array<i32: 0>} : vector<128x256xi32>
    %c15_i32 = arith.constant 15 : i32
    %38 = vector.broadcast %c15_i32 : i32 to vector<128x256xi32>
    %39 = arith.andi %37, %38 : vector<128x256xi32>
    %40 = arith.sitofp %39 : vector<128x256xi32> to vector<128x256xf32>
    %41 = vector.broadcast %36 : vector<1x256xf32> to vector<128x256xf32>
    %42 = arith.cmpf ole, %40, %41 : vector<128x256xf32>
    %cst_18 = arith.constant 0.000000e+00 : f32
    %43 = vector.broadcast %cst_18 : f32 to vector<128x256xf32>
    %44 = arith.select %42, %34, %43 : vector<128x256xi1>, vector<128x256xf32>
    %45 = vector.shape_cast %44 : vector<128x256xf32> to vector<8x16x256xf32>
    %cst_19 = arith.constant dense<0xFF800000> : vector<8x256xf32>
    %46 = vector.multi_reduction <maximumf>, %45, %cst_19 [1] : vector<8x16x256xf32> to vector<8x256xf32>
    %c176 = arith.constant 176 : index
    %c0_20 = arith.constant 0 : index
    %47 = vector.load %arg3[%c176, %c0_20] : memref<192x256xbf16, #tpu.memory_space<vmem>>, vector<1x256xbf16>
    %48 = arith.extf %47 : vector<1x256xbf16> to vector<1x256xf32>
    %c184 = arith.constant 184 : index
    %c0_21 = arith.constant 0 : index
    %49 = vector.load %arg3[%c184, %c0_21] : memref<192x256xbf16, #tpu.memory_space<vmem>>, vector<1x128xbf16>
    %50 = arith.extf %49 : vector<1x128xbf16> to vector<1x128xf32>
    %51 = vector.broadcast %48 : vector<1x256xf32> to vector<8x256xf32>
    %52 = arith.mulf %46, %51 : vector<8x256xf32>
    %cst_22 = arith.constant dense<0.000000e+00> : vector<8xf32>
    %53 = vector.multi_reduction <add>, %52, %cst_22 [1] : vector<8x256xf32> to vector<8xf32>
    %54 = vector.shape_cast %53 : vector<8xf32> to vector<8x1xf32>
    %55 = tpu.iota {dimensions = array<i32: 1>} : vector<8x128xi32>
    %c0_i32 = arith.constant 0 : i32
    %56 = vector.broadcast %c0_i32 : i32 to vector<8x128xi32>
    %57 = arith.cmpi eq, %55, %56 : vector<8x128xi32>
    %58 = vector.broadcast %54 : vector<8x1xf32> to vector<8x128xf32>
    %59 = vector.broadcast %50 : vector<1x128xf32> to vector<8x128xf32>
    %60 = arith.addf %58, %59 : vector<8x128xf32>
    %cst_23 = arith.constant 0.000000e+00 : f32
    %61 = vector.broadcast %cst_23 : f32 to vector<8x128xf32>
    %62 = arith.select %57, %60, %61 : vector<8x128xi1>, vector<8x128xf32>
    %c0_24 = arith.constant 0 : index
    %c0_25 = arith.constant 0 : index
    %63 = vector.load %arg4[%c0_24, %c0_25] : memref<8x128xf32, #tpu.memory_space<vmem>>, vector<8x128xf32>
    tpu.vector_store %arg4[%c0_24, %c0_25], %62 {strides = array<i32>} : memref<8x128xf32, #tpu.memory_space<vmem>>, vector<8x128xf32>,
    return
  }
  func.func @transform_0(%arg0: i32) -> (i32, i32) {
    %c0_i32 = arith.constant 0 : i32
    %c0_i32_0 = arith.constant 0 : i32
    return %arg0, %c0_i32 : i32, i32
  }
  func.func @transform_1(%arg0: i32) -> (i32, i32) {
    %c0_i32 = arith.constant 0 : i32
    %c0_i32_0 = arith.constant 0 : i32
    %c0_i32_1 = arith.constant 0 : i32
    return %c0_i32, %c0_i32_0 : i32, i32
  }
  func.func @transform_2(%arg0: i32) -> (i32, i32) {
    %c0_i32 = arith.constant 0 : i32
    %c0_i32_0 = arith.constant 0 : i32
    %c0_i32_1 = arith.constant 0 : i32
    return %c0_i32, %c0_i32_0 : i32, i32
  }
  func.func @transform_3(%arg0: i32) -> (i32, i32) {
    %c0_i32 = arith.constant 0 : i32
    %c0_i32_0 = arith.constant 0 : i32
    return %arg0, %c0_i32 : i32, i32
  }
}

</mosaic_0001>

<llo_original>
// kernel: cnn_text_forward.1
$region0: #{cnn_text_forward.1}
  #allocation0 [shape = 'u32[]', space=smem, size = 0x4, offset = 0x4, fixed_abs, tag = 'smem constant byte address 0x4 - core index']
  #allocation1 [shape = 'u32[144,128]{1,0:T(1,128)}', space=vmem, size = 0x12000, scoped, tag = 'internal scratch']
  #allocation2 [shape = 'bf16[128,160]{1,0:T(16,128)(2,1)}', space=vmem, size = 0x10000, scoped, tag = 'scratch operand']
  %s0 = inlined_call_operand.vmem [shape: s32[128,1], index: 0, kind: input, shape index: {}]
  %s1 = inlined_call_operand.vmem [shape: bf16[128,32], index: 1, kind: input, shape index: {}]
  %s2 = inlined_call_operand.vmem [shape: bf16[192,256], index: 2, kind: input, shape index: {}]
  %s3 = inlined_call_operand.vmem [shape: f32[8,128], index: 3, kind: output, shape index: {}]
  %s4 = sld [smem:[#allocation0]]
  $region22: #{cnn_text_forward.1} parent=0
    _
  %s6 = ssub.s32 1, %s4
  %s7 = scalar_select 0, %s6, %s4
  // Predicated region
  $region2: #{cnn_text_forward.1} parent=0 // pred_check
    _
  $region3: #{cnn_text_forward.1} parent=0 // pred_check_branch
    %9 = sbr.rel (0) target = $region5
  $region4: #{cnn_text_forward.1} parent=0 // pred_region
    _
  $region5: #{cnn_text_forward.1} parent=0 // pred_fallthru
    _
  // Predicated region
  $region6: #{cnn_text_forward.1} parent=0 // pred_check
    _
  $region7: #{cnn_text_forward.1} parent=0 // pred_check_branch
    %11 = sbr.rel (0) target = $region9
  $region8: #{cnn_text_forward.1} parent=0 // pred_region
    _
  $region9: #{cnn_text_forward.1} parent=0 // pred_fallthru
    _
  // Predicated region
  $region10: #{cnn_text_forward.1} parent=0 // pred_check
    _
  $region11: #{cnn_text_forward.1} parent=0 // pred_check_branch
    %13 = sbr.rel (0) target = $region13
  $region12: #{cnn_text_forward.1} parent=0 // pred_region
    _
  $region13: #{cnn_text_forward.1} parent=0 // pred_fallthru
    _
  %v15 = vld [vmem:[%s0] sm:$0xff]
  %v16 = vld [vmem:[%s0 + $0x8] sm:$0xff]
  %v17 = vld [vmem:[%s0 + $0x10] sm:$0xff]
  %v18 = vld [vmem:[%s0 + $0x18] sm:$0xff]
  %v19 = vld [vmem:[%s0 + $0x20] sm:$0xff]
  %v20 = vld [vmem:[%s0 + $0x28] sm:$0xff]
  %v21 = vld [vmem:[%s0 + $0x30] sm:$0xff]
  %v22 = vld [vmem:[%s0 + $0x38] sm:$0xff]
  %v23 = vld [vmem:[%s0 + $0x40] sm:$0xff]
  %v24 = vld [vmem:[%s0 + $0x48] sm:$0xff]
  %v25 = vld [vmem:[%s0 + $0x50] sm:$0xff]
  %v26 = vld [vmem:[%s0 + $0x58] sm:$0xff]
  %v27 = vld [vmem:[%s0 + $0x60] sm:$0xff]
  %v28 = vld [vmem:[%s0 + $0x68] sm:$0xff]
  %v29 = vld [vmem:[%s0 + $0x70] sm:$0xff]
  %v30 = vld [vmem:[%s0 + $0x78] sm:$0xff]
  %v31 = vlaneseq
  %v32 = vand.u32 %v31, 127
  %33 = vset.pattern.permute.xlu0 0
  %34 = vperm.xlu0 %33, %v15
  %v35 = vpop.permute.xlu0 %34
  %36 = vset.pattern.permute.xlu0 0
  %37 = vperm.xlu0 %36, %v16
  %v38 = vpop.permute.xlu0 %37
  %39 = vset.pattern.permute.xlu0 0
  %40 = vperm.xlu0 %39, %v17
  %v41 = vpop.permute.xlu0 %40
  %42 = vset.pattern.permute.xlu0 0
  %43 = vperm.xlu0 %42, %v18
  %v44 = vpop.permute.xlu0 %43
  %45 = vset.pattern.permute.xlu0 0
  %46 = vperm.xlu0 %45, %v19
  %v47 = vpop.permute.xlu0 %46
  %48 = vset.pattern.permute.xlu0 0
  %49 = vperm.xlu0 %48, %v20
  %v50 = vpop.permute.xlu0 %49
  %51 = vset.pattern.permute.xlu0 0
  %52 = vperm.xlu0 %51, %v21
  %v53 = vpop.permute.xlu0 %52
  %54 = vset.pattern.permute.xlu0 0
  %55 = vperm.xlu0 %54, %v22
  %v56 = vpop.permute.xlu0 %55
  %57 = vset.pattern.permute.xlu0 0
  %58 = vperm.xlu0 %57, %v23
  %v59 = vpop.permute.xlu0 %58
  %60 = vset.pattern.permute.xlu0 0
  %61 = vperm.xlu0 %60, %v24
  %v62 = vpop.permute.xlu0 %61
  %63 = vset.pattern.permute.xlu0 0
  %64 = vperm.xlu0 %63, %v25
  %v65 = vpop.permute.xlu0 %64
  %66 = vset.pattern.permute.xlu0 0
  %67 = vperm.xlu0 %66, %v26
  %v68 = vpop.permute.xlu0 %67
  %69 = vset.pattern.permute.xlu0 0
  %70 = vperm.xlu0 %69, %v27
  %v71 = vpop.permute.xlu0 %70
  %72 = vset.pattern.permute.xlu0 0
  %73 = vperm.xlu0 %72, %v28
  %v74 = vpop.permute.xlu0 %73
  %75 = vset.pattern.permute.xlu0 0
  %76 = vperm.xlu0 %75, %v29
  %v77 = vpop.permute.xlu0 %76
  %78 = vset.pattern.permute.xlu0 0
  %79 = vperm.xlu0 %78, %v30
  %v80 = vpop.permute.xlu0 %79
  %vm81 = vcmp.eq.s32.totalorder %v32, %v35
  %vm82 = vcmp.eq.s32.totalorder %v32, %v38
  %vm83 = vcmp.eq.s32.totalorder %v32, %v41
  %vm84 = vcmp.eq.s32.totalorder %v32, %v44
  %vm85 = vcmp.eq.s32.totalorder %v32, %v47
  %vm86 = vcmp.eq.s32.totalorder %v32, %v50
  %vm87 = vcmp.eq.s32.totalorder %v32, %v53
  %vm88 = vcmp.eq.s32.totalorder %v32, %v56
  %vm89 = vcmp.eq.s32.totalorder %v32, %v59
  %vm90 = vcmp.eq.s32.totalorder %v32, %v62
  %vm91 = vcmp.eq.s32.totalorder %v32, %v65
  %vm92 = vcmp.eq.s32.totalorder %v32, %v68
  %vm93 = vcmp.eq.s32.totalorder %v32, %v71
  %vm94 = vcmp.eq.s32.totalorder %v32, %v74
  %vm95 = vcmp.eq.s32.totalorder %v32, %v77
  %vm96 = vcmp.eq.s32.totalorder %v32, %v80
  %v97 = vsel %vm81, 1, 0
  %v98 = vsel %vm82, 1, 0
  %v99 = vsel %vm83, 1, 0
  %v100 = vsel %vm84, 1, 0
  %v101 = vsel %vm85, 1, 0
  %v102 = vsel %vm86, 1, 0
  %v103 = vsel %vm87, 1, 0
  %v104 = vsel %vm88, 1, 0
  %v105 = vsel %vm89, 1, 0
  %v106 = vsel %vm90, 1, 0
  %v107 = vsel %vm91, 1, 0
  %v108 = vsel %vm92, 1, 0
  %v109 = vsel %vm93, 1, 0
  %v110 = vsel %vm94, 1, 0
  %v111 = vsel %vm95, 1, 0
  %v112 = vsel %vm96, 1, 0
  %v113 = vcvt.s32.f32 %v97
  %v114 = vcvt.s32.f32 %v98
  %v115 = vcvt.s32.f32 %v99
  %v116 = vcvt.s32.f32 %v100
  %v117 = vcvt.s32.f32 %v101
  %v118 = vcvt.s32.f32 %v102
  %v119 = vcvt.s32.f32 %v103
  %v120 = vcvt.s32.f32 %v104
  %v121 = vcvt.s32.f32 %v105
  %v122 = vcvt.s32.f32 %v106
  %v123 = vcvt.s32.f32 %v107
  %v124 = vcvt.s32.f32 %v108
  %v125 = vcvt.s32.f32 %v109
  %v126 = vcvt.s32.f32 %v110
  %v127 = vcvt.s32.f32 %v111
  %v128 = vcvt.s32.f32 %v112
  %v129 = vpack.c.bf16 %v114, %v113
  %v130 = vpack.c.bf16 %v116, %v115
  %v131 = vpack.c.bf16 %v118, %v117
  %v132 = vpack.c.bf16 %v120, %v119
  %v133 = vpack.c.bf16 %v122, %v121
  %v134 = vpack.c.bf16 %v124, %v123
  %v135 = vpack.c.bf16 %v126, %v125
  %v136 = vpack.c.bf16 %v128, %v127
  %v137 = vld [vmem:[%s1] sm:$0xf]
  %v138 = vld [vmem:[%s1 + $0x4] sm:$0xf]
  %v139 = vld [vmem:[%s1 + $0x8] sm:$0xf]
  %v140 = vld [vmem:[%s1 + $0xc] sm:$0xf]
  %v141 = vld [vmem:[%s1 + $0x10] sm:$0xf]
  %v142 = vld [vmem:[%s1 + $0x14] sm:$0xf]
  %v143 = vld [vmem:[%s1 + $0x18] sm:$0xf]
  %v144 = vld [vmem:[%s1 + $0x1c] sm:$0xf]
  %v145 = vld [vmem:[%s1 + $0x20] sm:$0xf]
  %v146 = vld [vmem:[%s1 + $0x24] sm:$0xf]
  %v147 = vld [vmem:[%s1 + $0x28] sm:$0xf]
  %v148 = vld [vmem:[%s1 + $0x2c] sm:$0xf]
  %v149 = vld [vmem:[%s1 + $0x30] sm:$0xf]
  %v150 = vld [vmem:[%s1 + $0x34] sm:$0xf]
  %v151 = vld [vmem:[%s1 + $0x38] sm:$0xf]
  %v152 = vld [vmem:[%s1 + $0x3c] sm:$0xf]
  %v169 = vunpack.c.l.b16 %v137
  %v170 = vunpack.c.l.b16 %v138
  %v171 = vunpack.c.l.b16 %v139
  %v172 = vunpack.c.l.b16 %v140
  %v173 = vunpack.c.l.b16 %v141
  %v174 = vunpack.c.l.b16 %v142
  %v175 = vunpack.c.l.b16 %v143
  %v176 = vunpack.c.l.b16 %v144
  %v177 = vunpack.c.l.b16 %v145
  %v178 = vunpack.c.l.b16 %v146
  %v179 = vunpack.c.l.b16 %v147
  %v180 = vunpack.c.l.b16 %v148
  %v181 = vunpack.c.l.b16 %v149
  %v182 = vunpack.c.l.b16 %v150
  %v183 = vunpack.c.l.b16 %v151
  %v184 = vunpack.c.l.b16 %v152
  %v185 = vpack.c.b16 %v170, %v169
  %v186 = vpack.c.b16 %v172, %v171
  %v187 = vpack.c.b16 %v174, %v173
  %v188 = vpack.c.b16 %v176, %v175
  %v189 = vpack.c.b16 %v178, %v177
  %v190 = vpack.c.b16 %v180, %v179
  %v191 = vpack.c.b16 %v182, %v181
  %v192 = vpack.c.b16 %v184, %v183
  %201 = vmatprep.subr.bf16.mxu0 0
  %202 = vmatpush1.bf16.msra.mxu0 %v185
  %203 = vmatprep.subr.bf16.mxu0 0
  %204 = vmatpush1.bf16.msra.mxu0 %v186
  %205 = vmatprep.subr.bf16.mxu0 0
  %206 = vmatpush1.bf16.msra.mxu0 %v187
  %207 = vmatprep.subr.bf16.mxu0 0
  %208 = vmatpush1.bf16.msra.mxu0 %v188
  %209 = vmatprep.subr.bf16.mxu0 0
  %210 = vmatpush1.bf16.msra.mxu0 %v189
  %211 = vmatprep.subr.bf16.mxu0 0
  %212 = vmatpush1.bf16.msra.mxu0 %v190
  %213 = vmatprep.subr.bf16.mxu0 0
  %214 = vmatpush1.bf16.msra.mxu0 %v191
  %215 = vmatprep.subr.bf16.mxu0 0
  %216 = vmatpush1.bf16.msra.mxu0 %v192
  %217 = vmatprep.subr.bf16.mxu0 0
  %218 = vmatpush1.bf16.msra.mxu0 0
  %219 = vmatprep.subr.bf16.mxu0 0
  %220 = vmatpush1.bf16.msra.mxu0 0
  %221 = vmatprep.subr.bf16.mxu0 0
  %222 = vmatpush1.bf16.msra.mxu0 0
  %223 = vmatprep.subr.bf16.mxu0 0
  %224 = vmatpush1.bf16.msra.mxu0 0
  %225 = vmatprep.subr.bf16.mxu0 0
  %226 = vmatpush1.bf16.msra.mxu0 0
  %227 = vmatprep.subr.bf16.mxu0 0
  %228 = vmatpush1.bf16.msra.mxu0 0
  %229 = vmatprep.subr.bf16.mxu0 0
  %230 = vmatpush1.bf16.msra.mxu0 0
  %231 = vmatprep.subr.bf16.mxu0 0
  %232 = vmatpush1.bf16.msra.mxu0 0
  %233 = vmatprep.mubr.bf16.mxu0 0
  %234 = vmatmul.mubr.bf16.gmra.mrb[0].mxu0 %v129
  %v235 = vpop.f32.mrb[0].mxu0
  %v236 = vadd.f32 0.0, %v235
  %v237 = vpop.f32.mrb[0].mxu0
  %v238 = vpop.f32.mrb[0].mxu0
  %v239 = vadd.f32 0.0, %v238
  %v240 = vpop.f32.mrb[0].mxu0
  %241 = vmatprep.mubr.bf16.mxu0 0
  %242 = vmatmul.mubr.bf16.gmra.mrb[0].mxu0 %v130
  %v243 = vpop.f32.mrb[0].mxu0
  %v244 = vadd.f32 0.0, %v243
  %v245 = vpop.f32.mrb[0].mxu0
  %v246 = vpop.f32.mrb[0].mxu0
  %v247 = vadd.f32 0.0, %v246
  %v248 = vpop.f32.mrb[0].mxu0
  %249 = vmatprep.mubr.bf16.mxu0 0
  %250 = vmatmul.mubr.bf16.gmra.mrb[0].mxu0 %v131
  %v251 = vpop.f32.mrb[0].mxu0
  %v252 = vadd.f32 0.0, %v251
  %v253 = vpop.f32.mrb[0].mxu0
  %v254 = vpop.f32.mrb[0].mxu0
  %v255 = vadd.f32 0.0, %v254
  %v256 = vpop.f32.mrb[0].mxu0
  %257 = vmatprep.mubr.bf16.mxu0 0
  %258 = vmatmul.mubr.bf16.gmra.mrb[0].mxu0 %v132
  %v259 = vpop.f32.mrb[0].mxu0
  %v260 = vadd.f32 0.0, %v259
  %v261 = vpop.f32.mrb[0].mxu0
  %v262 = vpop.f32.mrb[0].mxu0
  %v263 = vadd.f32 0.0, %v262
  %v264 = vpop.f32.mrb[0].mxu0
  %265 = vmatprep.mubr.bf16.mxu0 0
  %266 = vmatmul.mubr.bf16.gmra.mrb[0].mxu0 %v133
  %v267 = vpop.f32.mrb[0].mxu0
  %v268 = vadd.f32 0.0, %v267
  %v269 = vpop.f32.mrb[0].mxu0
  %v270 = vpop.f32.mrb[0].mxu0
  %v271 = vadd.f32 0.0, %v270
  %v272 = vpop.f32.mrb[0].mxu0
  %273 = vmatprep.mubr.bf16.mxu0 0
  %274 = vmatmul.mubr.bf16.gmra.mrb[0].mxu0 %v134
  %v275 = vpop.f32.mrb[0].mxu0
  %v276 = vadd.f32 0.0, %v275
  %v277 = vpop.f32.mrb[0].mxu0
  %v278 = vpop.f32.mrb[0].mxu0
  %v279 = vadd.f32 0.0, %v278
  %v280 = vpop.f32.mrb[0].mxu0
  %281 = vmatprep.mubr.bf16.mxu0 0
  %282 = vmatmul.mubr.bf16.gmra.mrb[0].mxu0 %v135
  %v283 = vpop.f32.mrb[0].mxu0
  %v284 = vadd.f32 0.0, %v283
  %v285 = vpop.f32.mrb[0].mxu0
  %v286 = vpop.f32.mrb[0].mxu0
  %v287 = vadd.f32 0.0, %v286
  %v288 = vpop.f32.mrb[0].mxu0
  %289 = vmatprep.mubr.bf16.mxu0 0
  %290 = vmatmul.mubr.bf16.gmra.mrb[0].mxu0 %v136
  %v291 = vpop.f32.mrb[0].mxu0
  %v292 = vadd.f32 0.0, %v291
  %v293 = vpop.f32.mrb[0].mxu0
  %v294 = vpop.f32.mrb[0].mxu0
  %v295 = vadd.f32 0.0, %v294
  %v296 = vpop.f32.mrb[0].mxu0
  %297 = vdwg.mxu0
  %v298 = vpack.c.bf16 %v239, %v236
  %v299 = vpack.c.bf16 %v247, %v244
  %v300 = vpack.c.bf16 %v255, %v252
  %v301 = vpack.c.bf16 %v263, %v260
  %v302 = vpack.c.bf16 %v271, %v268
  %v303 = vpack.c.bf16 %v279, %v276
  %v304 = vpack.c.bf16 %v287, %v284
  %v305 = vpack.c.bf16 %v295, %v292
  %vm306 = vcmask 261120
  %307 = vst.msk [vmem:[#allocation2] sm:$0xff] %vm306, %v298
  %308 = vst.msk [vmem:[#allocation2 + $0x10] sm:$0xff] %vm306, %v299
  %309 = vst.msk [vmem:[#allocation2 + $0x20] sm:$0xff] %vm306, %v300
  %310 = vst.msk [vmem:[#allocation2 + $0x30] sm:$0xff] %vm306, %v301
  %311 = vst.msk [vmem:[#allocation2 + $0x40] sm:$0xff] %vm306, %v302
  %312 = vst.msk [vmem:[#allocation2 + $0x50] sm:$0xff] %vm306, %v303
  %313 = vst.msk [vmem:[#allocation2 + $0x60] sm:$0xff] %vm306, %v304
  %314 = vst.msk [vmem:[#allocation2 + $0x70] sm:$0xff] %vm306, %v305
  %v315 = vpack.c.bf16 0.0, 0.0
  %vm316 = vsmask.f32 7424
  %v318 = vshrl.u32 %v298, 16
  %v320 = vshll.u32 %v298, 16
  %v322 = vrot.slane %v320, 1
  %v323 = vor.u32 %v318, %v322
  %v325 = vshll.u32 %v299, 16
  %v327 = vrot.slane %v325, 1
  %v328 = vsel %vm316, %v323, %v327
  %v329 = vshrl.u32 %v299, 16
  %v331 = vor.u32 %v329, %v327
  %v333 = vshll.u32 %v300, 16
  %v335 = vrot.slane %v333, 1
  %v336 = vsel %vm316, %v331, %v335
  %v337 = vshrl.u32 %v300, 16
  %v339 = vor.u32 %v337, %v335
  %v341 = vshll.u32 %v301, 16
  %v343 = vrot.slane %v341, 1
  %v344 = vsel %vm316, %v339, %v343
  %v345 = vshrl.u32 %v301, 16
  %v347 = vor.u32 %v345, %v343
  %v349 = vshll.u32 %v302, 16
  %v351 = vrot.slane %v349, 1
  %v352 = vsel %vm316, %v347, %v351
  %v353 = vshrl.u32 %v302, 16
  %v355 = vor.u32 %v353, %v351
  %v357 = vshll.u32 %v303, 16
  %v359 = vrot.slane %v357, 1
  %v360 = vsel %vm316, %v355, %v359
  %v361 = vshrl.u32 %v303, 16
  %v363 = vor.u32 %v361, %v359
  %v365 = vshll.u32 %v304, 16
  %v367 = vrot.slane %v365, 1
  %v368 = vsel %vm316, %v363, %v367
  %v369 = vshrl.u32 %v304, 16
  %v371 = vor.u32 %v369, %v367
  %v373 = vshll.u32 %v305, 16
  %v375 = vrot.slane %v373, 1
  %v376 = vsel %vm316, %v371, %v375
  %v377 = vshrl.u32 %v305, 16
  %v379 = vor.u32 %v377, %v375
  %v381 = vshll.u32 %v315, 16
  %v383 = vrot.slane %v381, 1
  %v384 = vsel %vm316, %v379, %v383
  %385 = vrot.lane.b32.xlu0 %v328, 32
  %v386 = vpop.permute.xlu0 %385
  %387 = vrot.lane.b32.xlu0 %v336, 32
  %v388 = vpop.permute.xlu0 %387
  %389 = vrot.lane.b32.xlu0 %v344, 32
  %v390 = vpop.permute.xlu0 %389
  %391 = vrot.lane.b32.xlu0 %v352, 32
  %v392 = vpop.permute.xlu0 %391
  %393 = vrot.lane.b32.xlu0 %v360, 32
  %v394 = vpop.permute.xlu0 %393
  %395 = vrot.lane.b32.xlu0 %v368, 32
  %v396 = vpop.permute.xlu0 %395
  %397 = vrot.lane.b32.xlu0 %v376, 32
  %v398 = vpop.permute.xlu0 %397
  %399 = vrot.lane.b32.xlu0 %v384, 32
  %v400 = vpop.permute.xlu0 %399
  %vm409 = vcmask 523520
  %410 = vst.msk [vmem:[#allocation2] sm:$0xff] %vm409, %v386
  %411 = vst.msk [vmem:[#allocation2 + $0x10] sm:$0xff] %vm409, %v388
  %412 = vst.msk [vmem:[#allocation2 + $0x20] sm:$0xff] %vm409, %v390
  %413 = vst.msk [vmem:[#allocation2 + $0x30] sm:$0xff] %vm409, %v392
  %414 = vst.msk [vmem:[#allocation2 + $0x40] sm:$0xff] %vm409, %v394
  %415 = vst.msk [vmem:[#allocation2 + $0x50] sm:$0xff] %vm409, %v396
  %416 = vst.msk [vmem:[#allocation2 + $0x60] sm:$0xff] %vm409, %v398
  %417 = vst.msk [vmem:[#allocation2 + $0x70] sm:$0xff] %vm409, %v400
  %vm427 = vcmask 1046528
  %v428 = vrot.slane %v298, 1
  %v429 = vrot.slane %v299, 1
  %v430 = vsel %vm427, %v428, %v429
  %v431 = vrot.slane %v300, 1
  %v432 = vsel %vm427, %v429, %v431
  %v433 = vrot.slane %v301, 1
  %v434 = vsel %vm427, %v431, %v433
  %v435 = vrot.slane %v302, 1
  %v436 = vsel %vm427, %v433, %v435
  %v437 = vrot.slane %v303, 1
  %v438 = vsel %vm427, %v435, %v437
  %v439 = vrot.slane %v304, 1
  %v440 = vsel %vm427, %v437, %v439
  %v441 = vrot.slane %v305, 1
  %v442 = vsel %vm427, %v439, %v441
  %v443 = vrot.slane %v315, 1
  %v444 = vsel %vm427, %v441, %v443
  %445 = vrot.lane.b32.xlu0 %v430, 64
  %v446 = vpop.permute.xlu0 %445
  %447 = vrot.lane.b32.xlu0 %v432, 64
  %v448 = vpop.permute.xlu0 %447
  %449 = vrot.lane.b32.xlu0 %v434, 64
  %v450 = vpop.permute.xlu0 %449
  %451 = vrot.lane.b32.xlu0 %v436, 64
  %v452 = vpop.permute.xlu0 %451
  %453 = vrot.lane.b32.xlu0 %v438, 64
  %v454 = vpop.permute.xlu0 %453
  %455 = vrot.lane.b32.xlu0 %v440, 64
  %v456 = vpop.permute.xlu0 %455
  %457 = vrot.lane.b32.xlu0 %v442, 64
  %v458 = vpop.permute.xlu0 %457
  %459 = vrot.lane.b32.xlu0 %v444, 64
  %v460 = vpop.permute.xlu0 %459
  %vm469 = vcmask 785920
  %470 = vst.msk [vmem:[#allocation2] sm:$0xff] %vm469, %v446
  %471 = vst.msk [vmem:[#allocation2 + $0x10] sm:$0xff] %vm469, %v448
  %472 = vst.msk [vmem:[#allocation2 + $0x20] sm:$0xff] %vm469, %v450
  %473 = vst.msk [vmem:[#allocation2 + $0x30] sm:$0xff] %vm469, %v452
  %474 = vst.msk [vmem:[#allocation2 + $0x40] sm:$0xff] %vm469, %v454
  %475 = vst.msk [vmem:[#allocation2 + $0x50] sm:$0xff] %vm469, %v456
  %476 = vst.msk [vmem:[#allocation2 + $0x60] sm:$0xff] %vm469, %v458
  %477 = vst.msk [vmem:[#allocation2 + $0x70] sm:$0xff] %vm469, %v460
  %vm478 = vsmask.f32 6400
  %v479 = vrot.slane %v318, 1
  %v480 = vrot.slane %v320, 2
  %v481 = vor.u32 %v479, %v480
  %v482 = vrot.slane %v329, 1
  %v483 = vrot.slane %v325, 2
  %v484 = vor.u32 %v482, %v483
  %v485 = vsel %vm478, %v481, %v484
  %v486 = vrot.slane %v337, 1
  %v487 = vrot.slane %v333, 2
  %v488 = vor.u32 %v486, %v487
  %v489 = vsel %vm478, %v484, %v488
  %v490 = vrot.slane %v345, 1
  %v491 = vrot.slane %v341, 2
  %v492 = vor.u32 %v490, %v491
  %v493 = vsel %vm478, %v488, %v492
  %v494 = vrot.slane %v353, 1
  %v495 = vrot.slane %v349, 2
  %v496 = vor.u32 %v494, %v495
  %v497 = vsel %vm478, %v492, %v496
  %v498 = vrot.slane %v361, 1
  %v499 = vrot.slane %v357, 2
  %v500 = vor.u32 %v498, %v499
  %v501 = vsel %vm478, %v496, %v500
  %v502 = vrot.slane %v369, 1
  %v503 = vrot.slane %v365, 2
  %v504 = vor.u32 %v502, %v503
  %v505 = vsel %vm478, %v500, %v504
  %v506 = vrot.slane %v377, 1
  %v507 = vrot.slane %v373, 2
  %v508 = vor.u32 %v506, %v507
  %v509 = vsel %vm478, %v504, %v508
  %v510 = vshrl.u32 %v315, 16
  %v512 = vrot.slane %v510, 1
  %v513 = vrot.slane %v381, 2
  %v514 = vor.u32 %v512, %v513
  %v515 = vsel %vm478, %v508, %v514
  %516 = vrot.lane.b32.xlu0 %v485, 96
  %v517 = vpop.permute.xlu0 %516
  %518 = vrot.lane.b32.xlu0 %v489, 96
  %v519 = vpop.permute.xlu0 %518
  %520 = vrot.lane.b32.xlu0 %v493, 96
  %v521 = vpop.permute.xlu0 %520
  %522 = vrot.lane.b32.xlu0 %v497, 96
  %v523 = vpop.permute.xlu0 %522
  %524 = vrot.lane.b32.xlu0 %v501, 96
  %v525 = vpop.permute.xlu0 %524
  %526 = vrot.lane.b32.xlu0 %v505, 96
  %v527 = vpop.permute.xlu0 %526
  %528 = vrot.lane.b32.xlu0 %v509, 96
  %v529 = vpop.permute.xlu0 %528
  %530 = vrot.lane.b32.xlu0 %v515, 96
  %v531 = vpop.permute.xlu0 %530
  %vm540 = vcmask 1048320
  %541 = vst.msk [vmem:[#allocation2] sm:$0xff] %vm540, %v517
  %542 = vst.msk [vmem:[#allocation2 + $0x10] sm:$0xff] %vm540, %v519
  %543 = vst.msk [vmem:[#allocation2 + $0x20] sm:$0xff] %vm540, %v521
  %544 = vst.msk [vmem:[#allocation2 + $0x30] sm:$0xff] %vm540, %v523
  %545 = vst.msk [vmem:[#allocation2 + $0x40] sm:$0xff] %vm540, %v525
  %546 = vst.msk [vmem:[#allocation2 + $0x50] sm:$0xff] %vm540, %v527
  %547 = vst.msk [vmem:[#allocation2 + $0x60] sm:$0xff] %vm540, %v529
  %548 = vst.msk [vmem:[#allocation2 + $0x70] sm:$0xff] %vm540, %v531
  %vm549 = vcmask 1045504
  %v550 = vrot.slane %v298, 2
  %v551 = vrot.slane %v299, 2
  %v552 = vsel %vm549, %v550, %v551
  %v553 = vrot.slane %v300, 2
  %v554 = vsel %vm549, %v551, %v553
  %v555 = vrot.slane %v301, 2
  %v556 = vsel %vm549, %v553, %v555
  %v557 = vrot.slane %v302, 2
  %v558 = vsel %vm549, %v555, %v557
  %v559 = vrot.slane %v303, 2
  %v560 = vsel %vm549, %v557, %v559
  %v561 = vrot.slane %v304, 2
  %v562 = vsel %vm549, %v559, %v561
  %v563 = vrot.slane %v305, 2
  %v564 = vsel %vm549, %v561, %v563
  %v565 = vrot.slane %v315, 2
  %v566 = vsel %vm549, %v563, %v565
  %575 = vst.msk [vmem:[#allocation2 + $0x8] sm:$0xff] %vm306, %v552
  %576 = vst.msk [vmem:[#allocation2 + $0x18] sm:$0xff] %vm306, %v554
  %577 = vst.msk [vmem:[#allocation2 + $0x28] sm:$0xff] %vm306, %v556
  %578 = vst.msk [vmem:[#allocation2 + $0x38] sm:$0xff] %vm306, %v558
  %579 = vst.msk [vmem:[#allocation2 + $0x48] sm:$0xff] %vm306, %v560
  %580 = vst.msk [vmem:[#allocation2 + $0x58] sm:$0xff] %vm306, %v562
  %581 = vst.msk [vmem:[#allocation2 + $0x68] sm:$0xff] %vm306, %v564
  %582 = vst.msk [vmem:[#allocation2 + $0x78] sm:$0xff] %vm306, %v566
  %v583 = vld [vmem:[#allocation2] sm:$0xff]
  %v584 = vld [vmem:[#allocation2 + $0x8] sm:$0xff]
  %v585 = vld [vmem:[#allocation2 + $0x10] sm:$0xff]
  %v586 = vld [vmem:[#allocation2 + $0x18] sm:$0xff]
  %v587 = vld [vmem:[#allocation2 + $0x20] sm:$0xff]
  %v588 = vld [vmem:[#allocation2 + $0x28] sm:$0xff]
  %v589 = vld [vmem:[#allocation2 + $0x30] sm:$0xff]
  %v590 = vld [vmem:[#allocation2 + $0x38] sm:$0xff]
  %v591 = vld [vmem:[#allocation2 + $0x40] sm:$0xff]
  %v592 = vld [vmem:[#allocation2 + $0x48] sm:$0xff]
  %v593 = vld [vmem:[#allocation2 + $0x50] sm:$0xff]
  %v594 = vld [vmem:[#allocation2 + $0x58] sm:$0xff]
  %v595 = vld [vmem:[#allocation2 + $0x60] sm:$0xff]
  %v596 = vld [vmem:[#allocation2 + $0x68] sm:$0xff]
  %v597 = vld [vmem:[#allocation2 + $0x70] sm:$0xff]
  %v598 = vld [vmem:[#allocation2 + $0x78] sm:$0xff]
  %v599 = vld [vmem:[%s2] sm:$0xff]
  %v600 = vld [vmem:[%s2 + $0x8] sm:$0xff]
  %v601 = vld [vmem:[%s2 + $0x10] sm:$0xff]
  %v602 = vld [vmem:[%s2 + $0x18] sm:$0xff]
  %v603 = vld [vmem:[%s2 + $0x20] sm:$0xff]
  %v604 = vld [vmem:[%s2 + $0x28] sm:$0xff]
  %v605 = vld [vmem:[%s2 + $0x30] sm:$0xff]
  %v606 = vld [vmem:[%s2 + $0x38] sm:$0xff]
  %v607 = vld [vmem:[%s2 + $0x40] sm:$0xff]
  %v608 = vld [vmem:[%s2 + $0x48] sm:$0xff]
  %v609 = vld [vmem:[%s2 + $0x50] sm:$0xff]
  %v610 = vld [vmem:[%s2 + $0x58] sm:$0xff]
  %v611 = vld [vmem:[%s2 + $0x60] sm:$0xff]
  %v612 = vld [vmem:[%s2 + $0x68] sm:$0xff]
  %v613 = vld [vmem:[%s2 + $0x70] sm:$0xff]
  %v614 = vld [vmem:[%s2 + $0x78] sm:$0xff]
  %v615 = vld [vmem:[%s2 + $0x80] sm:$0xff]
  %v616 = vld [vmem:[%s2 + $0x88] sm:$0xff]
  %v617 = vld [vmem:[%s2 + $0x90] sm:$0xff]
  %v618 = vld [vmem:[%s2 + $0x98] sm:$0xff]
  %v619 = vld [vmem:[%s2 + $0xa0] sm:$0x11]
  %v620 = vunpack.c.l.bf16 %v619
  %v621 = vunpack.c.h.bf16 %v619
  %v622 = vlaneseq
  %v623 = vshrl.u32 %v622, 7
  %v624 = vsub.s32 0, %v623
  %v625 = vrot.slane %v620, %v624
  %v626 = vlaneseq
  %v627 = vshrl.u32 %v626, 7
  %v628 = vsub.s32 0, %v627
  %v629 = vrot.slane %v621, %v628
  %v650 = vunpack.c.l.b16 %v599
  %v651 = vunpack.c.h.b16 %v599
  %v652 = vunpack.c.l.b16 %v600
  %v653 = vunpack.c.h.b16 %v600
  %v654 = vunpack.c.l.b16 %v601
  %v655 = vunpack.c.h.b16 %v601
  %v656 = vunpack.c.l.b16 %v602
  %v657 = vunpack.c.h.b16 %v602
  %v658 = vunpack.c.l.b16 %v603
  %v659 = vunpack.c.h.b16 %v603
  %v660 = vunpack.c.l.b16 %v604
  %v661 = vunpack.c.h.b16 %v604
  %v662 = vunpack.c.l.b16 %v605
  %v663 = vunpack.c.h.b16 %v605
  %v664 = vunpack.c.l.b16 %v606
  %v665 = vunpack.c.h.b16 %v606
  %v666 = vunpack.c.l.b16 %v607
  %v667 = vunpack.c.h.b16 %v607
  %v668 = vunpack.c.l.b16 %v608
  %v669 = vunpack.c.h.b16 %v608
  %v670 = vunpack.c.l.b16 %v609
  %v671 = vunpack.c.h.b16 %v609
  %v672 = vunpack.c.l.b16 %v610
  %v673 = vunpack.c.h.b16 %v610
  %v674 = vunpack.c.l.b16 %v611
  %v675 = vunpack.c.h.b16 %v611
  %v676 = vunpack.c.l.b16 %v612
  %v677 = vunpack.c.h.b16 %v612
  %v678 = vunpack.c.l.b16 %v613
  %v679 = vunpack.c.h.b16 %v613
  %v680 = vunpack.c.l.b16 %v614
  %v681 = vunpack.c.h.b16 %v614
  %v682 = vunpack.c.l.b16 %v615
  %v683 = vunpack.c.h.b16 %v615
  %v684 = vunpack.c.l.b16 %v616
  %v685 = vunpack.c.h.b16 %v616
  %v686 = vunpack.c.l.b16 %v617
  %v687 = vunpack.c.h.b16 %v617
  %v688 = vunpack.c.l.b16 %v618
  %v689 = vunpack.c.h.b16 %v618
  %v690 = vpack.c.b16 %v652, %v650
  %v691 = vpack.c.b16 %v653, %v651
  %v692 = vpack.c.b16 %v656, %v654
  %v693 = vpack.c.b16 %v657, %v655
  %v694 = vpack.c.b16 %v660, %v658
  %v695 = vpack.c.b16 %v661, %v659
  %v696 = vpack.c.b16 %v664, %v662
  %v697 = vpack.c.b16 %v665, %v663
  %v698 = vpack.c.b16 %v668, %v666
  %v699 = vpack.c.b16 %v669, %v667
  %v700 = vpack.c.b16 %v672, %v670
  %v701 = vpack.c.b16 %v673, %v671
  %v702 = vpack.c.b16 %v676, %v674
  %v703 = vpack.c.b16 %v677, %v675
  %v704 = vpack.c.b16 %v680, %v678
  %v705 = vpack.c.b16 %v681, %v679
  %v706 = vpack.c.b16 %v684, %v682
  %v707 = vpack.c.b16 %v685, %v683
  %v708 = vpack.c.b16 %v688, %v686
  %v709 = vpack.c.b16 %v689, %v687
  %v731 = vsel %vm306, %v584, 0
  %v734 = vsel %vm306, %v586, 0
  %v737 = vsel %vm306, %v588, 0
  %v740 = vsel %vm306, %v590, 0
  %v743 = vsel %vm306, %v592, 0
  %v746 = vsel %vm306, %v594, 0
  %v749 = vsel %vm306, %v596, 0
  %v752 = vsel %vm306, %v598, 0
  %754 = vmatprep.subr.bf16.mxu0 %v691
  %755 = vmatpush1.bf16.msra.mxu0 %v690
  %756 = vmatprep.subr.bf16.mxu0 %v693
  %757 = vmatpush1.bf16.msra.mxu0 %v692
  %758 = vmatprep.subr.bf16.mxu0 %v695
  %759 = vmatpush1.bf16.msra.mxu0 %v694
  %760 = vmatprep.subr.bf16.mxu0 %v697
  %761 = vmatpush1.bf16.msra.mxu0 %v696
  %762 = vmatprep.subr.bf16.mxu0 %v699
  %763 = vmatpush1.bf16.msra.mxu0 %v698
  %764 = vmatprep.subr.bf16.mxu0 %v701
  %765 = vmatpush1.bf16.msra.mxu0 %v700
  %766 = vmatprep.subr.bf16.mxu0 %v703
  %767 = vmatpush1.bf16.msra.mxu0 %v702
  %768 = vmatprep.subr.bf16.mxu0 %v705
  %769 = vmatpush1.bf16.msra.mxu0 %v704
  %770 = vmatprep.subr.bf16.mxu0 %v707
  %771 = vmatpush1.bf16.msra.mxu0 %v706
  %772 = vmatprep.subr.bf16.mxu0 %v709
  %773 = vmatpush1.bf16.msra.mxu0 %v708
  %774 = vmatprep.subr.bf16.mxu0 0
  %775 = vmatpush1.bf16.msra.mxu0 0
  %776 = vmatprep.subr.bf16.mxu0 0
  %777 = vmatpush1.bf16.msra.mxu0 0
  %778 = vmatprep.subr.bf16.mxu0 0
  %779 = vmatpush1.bf16.msra.mxu0 0
  %780 = vmatprep.subr.bf16.mxu0 0
  %781 = vmatpush1.bf16.msra.mxu0 0
  %782 = vmatprep.subr.bf16.mxu0 0
  %783 = vmatpush1.bf16.msra.mxu0 0
  %784 = vmatprep.subr.bf16.mxu0 0
  %785 = vmatpush1.bf16.msra.mxu0 0
  %786 = vmatprep.mubr.bf16.mxu0 %v731
  %787 = vmatmul.mubr.bf16.gmra.mrb[0].mxu0 %v583
  %v788 = vpop.f32.mrb[0].mxu0
  %v789 = vadd.f32 %v625, %v788
  %v790 = vpop.f32.mrb[0].mxu0
  %v791 = vadd.f32 %v629, %v790
  %v792 = vpop.f32.mrb[0].mxu0
  %v793 = vadd.f32 %v625, %v792
  %v794 = vpop.f32.mrb[0].mxu0
  %v795 = vadd.f32 %v629, %v794
  %796 = vmatprep.mubr.bf16.mxu0 %v734
  %797 = vmatmul.mubr.bf16.gmra.mrb[0].mxu0 %v585
  %v798 = vpop.f32.mrb[0].mxu0
  %v799 = vadd.f32 %v625, %v798
  %v800 = vpop.f32.mrb[0].mxu0
  %v801 = vadd.f32 %v629, %v800
  %v802 = vpop.f32.mrb[0].mxu0
  %v803 = vadd.f32 %v625, %v802
  %v804 = vpop.f32.mrb[0].mxu0
  %v805 = vadd.f32 %v629, %v804
  %806 = vmatprep.mubr.bf16.mxu0 %v737
  %807 = vmatmul.mubr.bf16.gmra.mrb[0].mxu0 %v587
  %v808 = vpop.f32.mrb[0].mxu0
  %v809 = vadd.f32 %v625, %v808
  %v810 = vpop.f32.mrb[0].mxu0
  %v811 = vadd.f32 %v629, %v810
  %v812 = vpop.f32.mrb[0].mxu0
  %v813 = vadd.f32 %v625, %v812
  %v814 = vpop.f32.mrb[0].mxu0
  %v815 = vadd.f32 %v629, %v814
  %816 = vmatprep.mubr.bf16.mxu0 %v740
  %817 = vmatmul.mubr.bf16.gmra.mrb[0].mxu0 %v589
  %v818 = vpop.f32.mrb[0].mxu0
  %v819 = vadd.f32 %v625, %v818
  %v820 = vpop.f32.mrb[0].mxu0
  %v821 = vadd.f32 %v629, %v820
  %v822 = vpop.f32.mrb[0].mxu0
  %v823 = vadd.f32 %v625, %v822
  %v824 = vpop.f32.mrb[0].mxu0
  %v825 = vadd.f32 %v629, %v824
  %826 = vmatprep.mubr.bf16.mxu0 %v743
  %827 = vmatmul.mubr.bf16.gmra.mrb[0].mxu0 %v591
  %v828 = vpop.f32.mrb[0].mxu0
  %v829 = vadd.f32 %v625, %v828
  %v830 = vpop.f32.mrb[0].mxu0
  %v831 = vadd.f32 %v629, %v830
  %v832 = vpop.f32.mrb[0].mxu0
  %v833 = vadd.f32 %v625, %v832
  %v834 = vpop.f32.mrb[0].mxu0
  %v835 = vadd.f32 %v629, %v834
  %836 = vmatprep.mubr.bf16.mxu0 %v746
  %837 = vmatmul.mubr.bf16.gmra.mrb[0].mxu0 %v593
  %v838 = vpop.f32.mrb[0].mxu0
  %v839 = vadd.f32 %v625, %v838
  %v840 = vpop.f32.mrb[0].mxu0
  %v841 = vadd.f32 %v629, %v840
  %v842 = vpop.f32.mrb[0].mxu0
  %v843 = vadd.f32 %v625, %v842
  %v844 = vpop.f32.mrb[0].mxu0
  %v845 = vadd.f32 %v629, %v844
  %846 = vmatprep.mubr.bf16.mxu0 %v749
  %847 = vmatmul.mubr.bf16.gmra.mrb[0].mxu0 %v595
  %v848 = vpop.f32.mrb[0].mxu0
  %v849 = vadd.f32 %v625, %v848
  %v850 = vpop.f32.mrb[0].mxu0
  %v851 = vadd.f32 %v629, %v850
  %v852 = vpop.f32.mrb[0].mxu0
  %v853 = vadd.f32 %v625, %v852
  %v854 = vpop.f32.mrb[0].mxu0
  %v855 = vadd.f32 %v629, %v854
  %856 = vmatprep.mubr.bf16.mxu0 %v752
  %857 = vmatmul.mubr.bf16.gmra.mrb[0].mxu0 %v597
  %v858 = vpop.f32.mrb[0].mxu0
  %v859 = vadd.f32 %v625, %v858
  %v860 = vpop.f32.mrb[0].mxu0
  %v861 = vadd.f32 %v629, %v860
  %v862 = vpop.f32.mrb[0].mxu0
  %v863 = vadd.f32 %v625, %v862
  %v864 = vpop.f32.mrb[0].mxu0
  %v865 = vadd.f32 %v629, %v864
  %866 = vdwg.mxu0
  %v867 = vmax.f32 %v789, 0.0
  %v868 = vmax.f32 %v791, 0.0
  %v869 = vmax.f32 %v793, 0.0
  %v870 = vmax.f32 %v795, 0.0
  %v871 = vmax.f32 %v799, 0.0
  %v872 = vmax.f32 %v801, 0.0
  %v873 = vmax.f32 %v803, 0.0
  %v874 = vmax.f32 %v805, 0.0
  %v875 = vmax.f32 %v809, 0.0
  %v876 = vmax.f32 %v811, 0.0
  %v877 = vmax.f32 %v813, 0.0
  %v878 = vmax.f32 %v815, 0.0
  %v879 = vmax.f32 %v819, 0.0
  %v880 = vmax.f32 %v821, 0.0
  %v881 = vmax.f32 %v823, 0.0
  %v882 = vmax.f32 %v825, 0.0
  %v883 = vmax.f32 %v829, 0.0
  %v884 = vmax.f32 %v831, 0.0
  %v885 = vmax.f32 %v833, 0.0
  %v886 = vmax.f32 %v835, 0.0
  %v887 = vmax.f32 %v839, 0.0
  %v888 = vmax.f32 %v841, 0.0
  %v889 = vmax.f32 %v843, 0.0
  %v890 = vmax.f32 %v845, 0.0
  %v891 = vmax.f32 %v849, 0.0
  %v892 = vmax.f32 %v851, 0.0
  %v893 = vmax.f32 %v853, 0.0
  %v894 = vmax.f32 %v855, 0.0
  %v895 = vmax.f32 %v859, 0.0
  %v896 = vmax.f32 %v861, 0.0
  %v897 = vmax.f32 %v863, 0.0
  %v898 = vmax.f32 %v865, 0.0
  %v899 = vld [vmem:[%s2 + $0xa8] sm:$0x11]
  %v900 = vunpack.c.l.bf16 %v899
  %v901 = vunpack.c.h.bf16 %v899
  %v902 = vlaneseq
  %v903 = vshrl.u32 %v902, 7
  %v904 = vadd.s32 %v903, 8
  %v905 = vadd.s32 %v903, 16
  %v906 = vadd.s32 %v903, 24
  %v907 = vadd.s32 %v903, 32
  %v908 = vadd.s32 %v903, 40
  %v909 = vadd.s32 %v903, 48
  %v910 = vadd.s32 %v903, 56
  %v911 = vadd.s32 %v903, 64
  %v912 = vadd.s32 %v903, 72
  %v913 = vadd.s32 %v903, 80
  %v914 = vadd.s32 %v903, 88
  %v915 = vadd.s32 %v903, 96
  %v916 = vadd.s32 %v903, 104
  %v917 = vadd.s32 %v903, 112
  %v918 = vadd.s32 %v903, 120
  %v919 = vand.u32 %v903, 15
  %v920 = vand.u32 %v904, 15
  %v921 = vand.u32 %v905, 15
  %v922 = vand.u32 %v906, 15
  %v923 = vand.u32 %v907, 15
  %v924 = vand.u32 %v908, 15
  %v925 = vand.u32 %v909, 15
  %v926 = vand.u32 %v910, 15
  %v927 = vand.u32 %v911, 15
  %v928 = vand.u32 %v912, 15
  %v929 = vand.u32 %v913, 15
  %v930 = vand.u32 %v914, 15
  %v931 = vand.u32 %v915, 15
  %v932 = vand.u32 %v916, 15
  %v933 = vand.u32 %v917, 15
  %v934 = vand.u32 %v918, 15
  %v935 = vcvt.s32.f32 %v919
  %v936 = vcvt.s32.f32 %v920
  %v937 = vcvt.s32.f32 %v921
  %v938 = vcvt.s32.f32 %v922
  %v939 = vcvt.s32.f32 %v923
  %v940 = vcvt.s32.f32 %v924
  %v941 = vcvt.s32.f32 %v925
  %v942 = vcvt.s32.f32 %v926
  %v943 = vcvt.s32.f32 %v927
  %v944 = vcvt.s32.f32 %v928
  %v945 = vcvt.s32.f32 %v929
  %v946 = vcvt.s32.f32 %v930
  %v947 = vcvt.s32.f32 %v931
  %v948 = vcvt.s32.f32 %v932
  %v949 = vcvt.s32.f32 %v933
  %v950 = vcvt.s32.f32 %v934
  %v951 = vlaneseq
  %v952 = vshrl.u32 %v951, 7
  %v953 = vsub.s32 0, %v952
  %v954 = vrot.slane %v900, %v953
  %v955 = vlaneseq
  %v956 = vshrl.u32 %v955, 7
  %v957 = vsub.s32 0, %v956
  %v958 = vrot.slane %v901, %v957
  %vm959 = vcmp.le.f32.partialorder %v935, %v954
  %vm960 = vcmp.le.f32.partialorder %v935, %v958
  %vm961 = vcmp.le.f32.partialorder %v936, %v954
  %vm962 = vcmp.le.f32.partialorder %v936, %v958
  %vm963 = vcmp.le.f32.partialorder %v937, %v954
  %vm964 = vcmp.le.f32.partialorder %v937, %v958
  %vm965 = vcmp.le.f32.partialorder %v938, %v954
  %vm966 = vcmp.le.f32.partialorder %v938, %v958
  %vm967 = vcmp.le.f32.partialorder %v939, %v954
  %vm968 = vcmp.le.f32.partialorder %v939, %v958
  %vm969 = vcmp.le.f32.partialorder %v940, %v954
  %vm970 = vcmp.le.f32.partialorder %v940, %v958
  %vm971 = vcmp.le.f32.partialorder %v941, %v954
  %vm972 = vcmp.le.f32.partialorder %v941, %v958
  %vm973 = vcmp.le.f32.partialorder %v942, %v954
  %vm974 = vcmp.le.f32.partialorder %v942, %v958
  %vm975 = vcmp.le.f32.partialorder %v943, %v954
  %vm976 = vcmp.le.f32.partialorder %v943, %v958
  %vm977 = vcmp.le.f32.partialorder %v944, %v954
  %vm978 = vcmp.le.f32.partialorder %v944, %v958
  %vm979 = vcmp.le.f32.partialorder %v945, %v954
  %vm980 = vcmp.le.f32.partialorder %v945, %v958
  %vm981 = vcmp.le.f32.partialorder %v946, %v954
  %vm982 = vcmp.le.f32.partialorder %v946, %v958
  %vm983 = vcmp.le.f32.partialorder %v947, %v954
  %vm984 = vcmp.le.f32.partialorder %v947, %v958
  %vm985 = vcmp.le.f32.partialorder %v948, %v954
  %vm986 = vcmp.le.f32.partialorder %v948, %v958
  %vm987 = vcmp.le.f32.partialorder %v949, %v954
  %vm988 = vcmp.le.f32.partialorder %v949, %v958
  %vm989 = vcmp.le.f32.partialorder %v950, %v954
  %vm990 = vcmp.le.f32.partialorder %v950, %v958
  %v991 = vsel %vm959, %v867, 0.0
  %v992 = vsel %vm960, %v868, 0.0
  %v993 = vsel %vm961, %v869, 0.0
  %v994 = vsel %vm962, %v870, 0.0
  %v995 = vsel %vm963, %v871, 0.0
  %v996 = vsel %vm964, %v872, 0.0
  %v997 = vsel %vm965, %v873, 0.0
  %v998 = vsel %vm966, %v874, 0.0
  %v999 = vsel %vm967, %v875, 0.0
  %v1000 = vsel %vm968, %v876, 0.0
  %v1001 = vsel %vm969, %v877, 0.0
  %v1002 = vsel %vm970, %v878, 0.0
  %v1003 = vsel %vm971, %v879, 0.0
  %v1004 = vsel %vm972, %v880, 0.0
  %v1005 = vsel %vm973, %v881, 0.0
  %v1006 = vsel %vm974, %v882, 0.0
  %v1007 = vsel %vm975, %v883, 0.0
  %v1008 = vsel %vm976, %v884, 0.0
  %v1009 = vsel %vm977, %v885, 0.0
  %v1010 = vsel %vm978, %v886, 0.0
  %v1011 = vsel %vm979, %v887, 0.0
  %v1012 = vsel %vm980, %v888, 0.0
  %v1013 = vsel %vm981, %v889, 0.0
  %v1014 = vsel %vm982, %v890, 0.0
  %v1015 = vsel %vm983, %v891, 0.0
  %v1016 = vsel %vm984, %v892, 0.0
  %v1017 = vsel %vm985, %v893, 0.0
  %v1018 = vsel %vm986, %v894, 0.0
  %v1019 = vsel %vm987, %v895, 0.0
  %v1020 = vsel %vm988, %v896, 0.0
  %v1021 = vsel %vm989, %v897, 0.0
  %v1022 = vsel %vm990, %v898, 0.0
  %v1023 = vmax.f32 %v991, %v993
  %v1024 = vrot.slane %v1023, 4
  %v1025 = vmax.f32 %v1023, %v1024
  %v1026 = vrot.slane %v1025, 2
  %v1027 = vmax.f32 %v1025, %v1026
  %v1028 = vrot.slane %v1027, 1
  %v1029 = vmax.f32 %v1027, %v1028
  %v1030 = vmax.f32 %v992, %v994
  %v1031 = vrot.slane %v1030, 4
  %v1032 = vmax.f32 %v1030, %v1031
  %v1033 = vrot.slane %v1032, 2
  %v1034 = vmax.f32 %v1032, %v1033
  %v1035 = vrot.slane %v1034, 1
  %v1036 = vmax.f32 %v1034, %v1035
  %v1037 = vmax.f32 %v995, %v997
  %v1038 = vrot.slane %v1037, 4
  %v1039 = vmax.f32 %v1037, %v1038
  %v1040 = vrot.slane %v1039, 2
  %v1041 = vmax.f32 %v1039, %v1040
  %v1042 = vrot.slane %v1041, 1
  %v1043 = vmax.f32 %v1041, %v1042
  %v1044 = vmax.f32 %v996, %v998
  %v1045 = vrot.slane %v1044, 4
  %v1046 = vmax.f32 %v1044, %v1045
  %v1047 = vrot.slane %v1046, 2
  %v1048 = vmax.f32 %v1046, %v1047
  %v1049 = vrot.slane %v1048, 1
  %v1050 = vmax.f32 %v1048, %v1049
  %v1051 = vmax.f32 %v999, %v1001
  %v1052 = vrot.slane %v1051, 4
  %v1053 = vmax.f32 %v1051, %v1052
  %v1054 = vrot.slane %v1053, 2
  %v1055 = vmax.f32 %v1053, %v1054
  %v1056 = vrot.slane %v1055, 1
  %v1057 = vmax.f32 %v1055, %v1056
  %v1058 = vmax.f32 %v1000, %v1002
  %v1059 = vrot.slane %v1058, 4
  %v1060 = vmax.f32 %v1058, %v1059
  %v1061 = vrot.slane %v1060, 2
  %v1062 = vmax.f32 %v1060, %v1061
  %v1063 = vrot.slane %v1062, 1
  %v1064 = vmax.f32 %v1062, %v1063
  %v1065 = vmax.f32 %v1003, %v1005
  %v1066 = vrot.slane %v1065, 4
  %v1067 = vmax.f32 %v1065, %v1066
  %v1068 = vrot.slane %v1067, 2
  %v1069 = vmax.f32 %v1067, %v1068
  %v1070 = vrot.slane %v1069, 1
  %v1071 = vmax.f32 %v1069, %v1070
  %v1072 = vmax.f32 %v1004, %v1006
  %v1073 = vrot.slane %v1072, 4
  %v1074 = vmax.f32 %v1072, %v1073
  %v1075 = vrot.slane %v1074, 2
  %v1076 = vmax.f32 %v1074, %v1075
  %v1077 = vrot.slane %v1076, 1
  %v1078 = vmax.f32 %v1076, %v1077
  %v1079 = vmax.f32 %v1007, %v1009
  %v1080 = vrot.slane %v1079, 4
  %v1081 = vmax.f32 %v1079, %v1080
  %v1082 = vrot.slane %v1081, 2
  %v1083 = vmax.f32 %v1081, %v1082
  %v1084 = vrot.slane %v1083, 1
  %v1085 = vmax.f32 %v1083, %v1084
  %v1086 = vmax.f32 %v1008, %v1010
  %v1087 = vrot.slane %v1086, 4
  %v1088 = vmax.f32 %v1086, %v1087
  %v1089 = vrot.slane %v1088, 2
  %v1090 = vmax.f32 %v1088, %v1089
  %v1091 = vrot.slane %v1090, 1
  %v1092 = vmax.f32 %v1090, %v1091
  %v1093 = vmax.f32 %v1011, %v1013
  %v1094 = vrot.slane %v1093, 4
  %v1095 = vmax.f32 %v1093, %v1094
  %v1096 = vrot.slane %v1095, 2
  %v1097 = vmax.f32 %v1095, %v1096
  %v1098 = vrot.slane %v1097, 1
  %v1099 = vmax.f32 %v1097, %v1098
  %v1100 = vmax.f32 %v1012, %v1014
  %v1101 = vrot.slane %v1100, 4
  %v1102 = vmax.f32 %v1100, %v1101
  %v1103 = vrot.slane %v1102, 2
  %v1104 = vmax.f32 %v1102, %v1103
  %v1105 = vrot.slane %v1104, 1
  %v1106 = vmax.f32 %v1104, %v1105
  %v1107 = vmax.f32 %v1015, %v1017
  %v1108 = vrot.slane %v1107, 4
  %v1109 = vmax.f32 %v1107, %v1108
  %v1110 = vrot.slane %v1109, 2
  %v1111 = vmax.f32 %v1109, %v1110
  %v1112 = vrot.slane %v1111, 1
  %v1113 = vmax.f32 %v1111, %v1112
  %v1114 = vmax.f32 %v1016, %v1018
  %v1115 = vrot.slane %v1114, 4
  %v1116 = vmax.f32 %v1114, %v1115
  %v1117 = vrot.slane %v1116, 2
  %v1118 = vmax.f32 %v1116, %v1117
  %v1119 = vrot.slane %v1118, 1
  %v1120 = vmax.f32 %v1118, %v1119
  %v1121 = vmax.f32 %v1019, %v1021
  %v1122 = vrot.slane %v1121, 4
  %v1123 = vmax.f32 %v1121, %v1122
  %v1124 = vrot.slane %v1123, 2
  %v1125 = vmax.f32 %v1123, %v1124
  %v1126 = vrot.slane %v1125, 1
  %v1127 = vmax.f32 %v1125, %v1126
  %v1128 = vmax.f32 %v1020, %v1022
  %v1129 = vrot.slane %v1128, 4
  %v1130 = vmax.f32 %v1128, %v1129
  %v1131 = vrot.slane %v1130, 2
  %v1132 = vmax.f32 %v1130, %v1131
  %v1133 = vrot.slane %v1132, 1
  %v1134 = vmax.f32 %v1132, %v1133
  %v1135 = vld [vmem:[%s2 + $0xb0] sm:$0x11]
  %v1136 = vunpack.c.l.bf16 %v1135
  %v1137 = vunpack.c.h.bf16 %v1135
  %v1138 = vld [vmem:[%s2 + $0xb8] sm:$0x1]
  %v1139 = vunpack.c.l.bf16 %v1138
  %v1140 = vlaneseq
  %v1141 = vshrl.u32 %v1140, 7
  %v1142 = vsub.s32 0, %v1141
  %v1143 = vrot.slane %v1136, %v1142
  %v1144 = vlaneseq
  %v1145 = vshrl.u32 %v1144, 7
  %v1146 = vsub.s32 0, %v1145
  %v1147 = vrot.slane %v1137, %v1146
  %v1148 = vmul.f32 %v1029, %v1143
  %v1149 = vmul.f32 %v1036, %v1147
  %v1150 = vmul.f32 %v1043, %v1143
  %v1151 = vmul.f32 %v1050, %v1147
  %v1152 = vmul.f32 %v1057, %v1143
  %v1153 = vmul.f32 %v1064, %v1147
  %v1154 = vmul.f32 %v1071, %v1143
  %v1155 = vmul.f32 %v1078, %v1147
  %v1156 = vmul.f32 %v1085, %v1143
  %v1157 = vmul.f32 %v1092, %v1147
  %v1158 = vmul.f32 %v1099, %v1143
  %v1159 = vmul.f32 %v1106, %v1147
  %v1160 = vmul.f32 %v1113, %v1143
  %v1161 = vmul.f32 %v1120, %v1147
  %v1162 = vmul.f32 %v1127, %v1143
  %v1163 = vmul.f32 %v1134, %v1147
  %v1180 = vrot.slane %v1150, 7
  %vm1181 = vcmask 1041409
  %v1182 = vsel %vm1181, %v1180, %v1148
  %v1183 = vrot.slane %v1152, 6
  %vm1184 = vcmask 1042434
  %v1185 = vsel %vm1184, %v1183, %v1182
  %v1186 = vrot.slane %v1154, 5
  %vm1187 = vcmask 1043459
  %v1188 = vsel %vm1187, %v1186, %v1185
  %v1189 = vrot.slane %v1156, 4
  %vm1190 = vcmask 1044484
  %v1191 = vsel %vm1190, %v1189, %v1188
  %v1192 = vrot.slane %v1158, 3
  %vm1193 = vcmask 1045509
  %v1194 = vsel %vm1193, %v1192, %v1191
  %v1195 = vrot.slane %v1160, 2
  %vm1196 = vcmask 1046534
  %v1197 = vsel %vm1196, %v1195, %v1194
  %v1198 = vrot.slane %v1162, 1
  %vm1199 = vcmask 1047559
  %v1200 = vsel %vm1199, %v1198, %v1197
  %v1201 = vrot.slane %v1151, 7
  %v1202 = vsel %vm1181, %v1201, %v1149
  %v1203 = vrot.slane %v1153, 6
  %v1204 = vsel %vm1184, %v1203, %v1202
  %v1205 = vrot.slane %v1155, 5
  %v1206 = vsel %vm1187, %v1205, %v1204
  %v1207 = vrot.slane %v1157, 4
  %v1208 = vsel %vm1190, %v1207, %v1206
  %v1209 = vrot.slane %v1159, 3
  %v1210 = vsel %vm1193, %v1209, %v1208
  %v1211 = vrot.slane %v1161, 2
  %v1212 = vsel %vm1196, %v1211, %v1210
  %v1213 = vrot.slane %v1163, 1
  %v1214 = vsel %vm1199, %v1213, %v1212
  %v1217 = vadd.f32 %v1200, %v1214
  %1218 = vadd.xlane.f32.xlu0 %v1217
  %v1219 = vpop.xlane.xlu0 %1218
  %vm1220 = vcmp.eq.s32.totalorder %v32, 0
  %v1221 = vlaneseq
  %v1222 = vshrl.u32 %v1221, 7
  %v1223 = vsub.s32 0, %v1222
  %v1224 = vrot.slane %v1139, %v1223
  %v1225 = vadd.f32 %v1219, %v1224
  %v1226 = vsel %vm1220, %v1225, 0.0
  %1227 = vst [vmem:[%s3] sm:$0xff] %v1226
  // Predicated region
  $region14: #{cnn_text_forward.1} parent=0 // pred_check
    _
  $region15: #{cnn_text_forward.1} parent=0 // pred_check_branch
    %1229 = sbr.rel (0) target = $region17
  $region16: #{cnn_text_forward.1} parent=0 // pred_region
    _
  $region17: #{cnn_text_forward.1} parent=0 // pred_fallthru
    _
  // Predicated region
  $region18: #{cnn_text_forward.1} parent=0 // pred_check
    _
  $region19: #{cnn_text_forward.1} parent=0 // pred_check_branch
    %1231 = sbr.rel (0) target = $region21
  $region20: #{cnn_text_forward.1} parent=0 // pred_region
    _
  $region21: #{cnn_text_forward.1} parent=0 // pred_fallthru
    _

</llo_original>
